<compile_context>
chip_gen: v5e
topology: v5e:2x2
jax: 0.10.0
libtpu: 0.0.40
codegen_flags: <defaults>
</compile_context>

<pallas_src>
import jax
import jax.numpy as jnp
from jax import lax
from jax.experimental import pallas as pl
from jax.experimental.pallas import tpu as pltpu

B, DIN, DQ, DK, DV = 5, 64, 32, 32, 32
BP = 8                              # batch rows padded to a full sublane tile
DINP = DIN + 1                      # +1 ones-column -> bias folded into the matmul
LANES = 128                         # packed hidden width (96 used, zero-padded)
V_OFF, Q_OFF, K_OFF = 0, DV, DV + DQ   # packed layout: [ v1 | q1 | scale*k1 | 0 ]


def sfdp_kernel(x_ref, w_ref, o_ref):
    # One fused bf16 MXU projection; bias is the last row of w (ones column in x):
    #   h = [ v1 | q1 | scale*k1 | 0-pad ]                                (BP, 128) f32
    h = jnp.dot(x_ref[...], w_ref[...], preferred_element_type=jnp.float32)
    q1 = h[:, Q_OFF:Q_OFF + DQ]                                           # (BP, DQ)
    k1s = h[:, K_OFF:K_OFF + DK]                                          # (BP, DK), 1/32 folded in

    # scores = scale * (q1 @ k1^T); contract axis 1 of both -> no explicit transpose
    scores = lax.dot_general(q1, k1s, (((1,), (1,)), ((), ())),
                             preferred_element_type=jnp.float32)          # (BP, BP)
    # Padded key columns (rows B..BP-1) must not enter the softmax normalization.
    col = lax.broadcasted_iota(jnp.int32, (BP, BP), 1)
    scores = jnp.where(col < B, scores, -1e30)
    # module mask (B,1) broadcast along the softmax axis is a per-row shift -> no-op

    # Numerically stable softmax; divide via EUP approximate reciprocal (free slot).
    s = scores - jnp.max(scores, axis=-1, keepdims=True)
    e = jnp.exp(s)
    attn = e * pl.reciprocal(jnp.sum(e, axis=-1, keepdims=True), approx=True)

    # Lane-dense output slab; columns [0, DV) are softmax(p) @ v1.
    o_ref[...] = jnp.dot(attn, h, preferred_element_type=jnp.float32)


def pack_params(params):
    """Fold the projection chain, the 1/32 scale and all biases into one bf16 weight."""
    weight, wq, bq, wk, bk, wv, bv, _mask = params
    scale = weight[0]                                   # 1/32
    w_qv = wq @ wv                                      # x @ w_qv (+ b_qv) == value(q1)
    b_qv = bq @ wv + bv
    w_qk = (wq @ wk) * scale                            # x @ w_qk (+ b_qk) == scale*key(q1)
    b_qk = (bq @ wk + bk) * scale
    w = jnp.concatenate([w_qv, wq, w_qk], axis=1)       # (DIN, 96)   [ v | q | s*k ]
    b = jnp.concatenate([b_qv, bq, b_qk], axis=1)       # (1, 96)
    wpack = jnp.concatenate([w, b], axis=0)             # (DIN+1, 96), bias = last row
    wpack = jnp.pad(wpack, ((0, 0), (0, LANES - wpack.shape[1])))
    return wpack.astype(jnp.bfloat16)                   # bf16 MXU operand


@jax.jit
def model_forward(x_stack, wpack):
    """x_stack: (N, B, DIN) f32 -> (N, B, DV) f32.  N independent problems, one launch."""
    n = x_stack.shape[0]
    ones = jnp.ones((n, B, 1), jnp.float32)
    x_aug = jnp.concatenate([x_stack, ones], axis=-1)          # bias column at DIN
    x_aug = jnp.pad(x_aug, ((0, 0), (0, BP - B), (0, 0)))      # pad rows to 8 sublanes
    x_aug = x_aug.astype(jnp.bfloat16)

    out_slab = pl.pallas_call(
        sfdp_kernel,
        out_shape=jax.ShapeDtypeStruct((n, BP, LANES), jnp.float32),
        grid=(n,),
        in_specs=[
            pl.BlockSpec((None, BP, DINP), lambda i: (i, 0, 0)),   # one problem / step
            pl.BlockSpec((DINP, LANES), lambda i: (0, 0)),         # weight stays resident
        ],
        out_specs=pl.BlockSpec((None, BP, LANES), lambda i: (i, 0, 0)),
        compiler_params=pltpu.CompilerParams(
            dimension_semantics=("parallel",)),                    # v7x: shard over 2 TCs
    )(x_aug, wpack)

    return out_slab[:, :B, :DV]                                    # prefix slice


def init_params(key):
    ks = jax.random.split(key, 6)

    def linear(kw, kb, fan_in, fan_out):
        bound = 1.0 / jnp.sqrt(fan_in)
        w = jax.random.uniform(kw, (fan_in, fan_out), jnp.float32, -bound, bound)
        b = jax.random.uniform(kb, (1, fan_out), jnp.float32, -bound, bound)
        return w, b

    wq, bq = linear(ks[0], ks[1], DIN, DQ)
    wk, bk = linear(ks[2], ks[3], DQ, DK)
    wv, bv = linear(ks[4], ks[5], DQ, DV)
    weight = jnp.array([32 / 32 / 32, 16 / 32 / 16], dtype=jnp.float32)  # [1/32, 1/32]
    mask = jnp.array([[0.0], [0.0], [0.0], [1.0], [1.0]], dtype=jnp.float32)
    return weight, wq, bq, wk, bk, wv, bv, mask


def reference_forward(x, params):
    """Pure-JAX f32 reference of the (repaired) module forward."""
    weight, wq, bq, wk, bk, wv, bv, mask = params
    q1 = x @ wq + bq
    k1 = q1 @ wk + bk
    v1 = q1 @ wv + bv
    p = weight[0] * (q1 @ k1.T) + mask                 # mask (B,1) is a softmax no-op
    return jax.nn.softmax(p, axis=-1) @ v1


if __name__ == "__main__":
    N = 4                                              # batched grid; N=1 also works
    key = jax.random.PRNGKey(0)
    k_x, k_p = jax.random.split(key)
    x_stack = jax.random.normal(k_x, (N, B, DIN), dtype=jnp.float32)
    params = init_params(k_p)
    wpack = pack_params(params)

    out = jax.block_until_ready(model_forward(x_stack, wpack))
    ref = jnp.stack([reference_forward(x_stack[i], params) for i in range(N)])

    assert out.shape == (N, B, DV)
    # Tolerance covers bf16 projection operands, the hardware-approximate
    # reciprocal, and the precomposed-weight reassociation.
    assert jnp.allclose(out, ref, atol=5e-3, rtol=5e-3), "mismatch vs JAX reference"
    print("KERNEL_OK")
</pallas_src>

<mosaic_0001>
module attributes {stable_mosaic.version = 11 : i64} {
  func.func @sfdp_kernel(%arg0: i32, %arg1: memref<1x8x65xbf16, #tpu.memory_space<vmem>>, %arg2: memref<65x128xbf16, #tpu.memory_space<vmem>>, %arg3: memref<1x8x128xf32, #tpu.memory_space<vmem>>) attributes {dimension_semantics = [#tpu.dimension_semantics<parallel>], iteration_bounds = array<i64: 4>, scalar_prefetch = 0 : i64, scratch_operands = 0 : i64, tpu.core_type = #tpu.core_type<tc>, window_params = [{transform_indices = @transform_0, window_bounds = array<i64: 1, 8, 65>}, {pipeline_mode = #tpu.pipeline_mode<synchronous>, transform_indices = @transform_1, window_bounds = array<i64: 65, 128>}, {transform_indices = @transform_2, window_bounds = array<i64: 1, 8, 128>}]} {
    %c0 = arith.constant 0 : index
    %c0_0 = arith.constant 0 : index
    %c0_1 = arith.constant 0 : index
    %0 = vector.load %arg1[%c0, %c0_0, %c0_1] : memref<1x8x65xbf16, #tpu.memory_space<vmem>>, vector<1x8x65xbf16>
    %1 = vector.shape_cast %0 : vector<1x8x65xbf16> to vector<8x65xbf16>
    %c0_2 = arith.constant 0 : index
    %c0_3 = arith.constant 0 : index
    %2 = vector.load %arg2[%c0_2, %c0_3] : memref<65x128xbf16, #tpu.memory_space<vmem>>, vector<65x128xbf16>
    %cst = arith.constant dense<0.000000e+00> : vector<8x128xf32>
    %3 = tpu.matmul %1, %2, %cst {dimension_numbers = #tpu.dot_dimension_numbers<[1], [0], [0], [1], [0, 0, 1, 1], [], []>} : vector<8x65xbf16>, vector<65x128xbf16>, vector<8x128xf32> -> vector<8x128xf32>
    %4 = vector.extract_strided_slice %3 {offsets = [0, 32], sizes = [8, 32], strides = [1, 1]} : vector<8x128xf32> to vector<8x32xf32>
    %5 = vector.extract_strided_slice %3 {offsets = [0, 64], sizes = [8, 32], strides = [1, 1]} : vector<8x128xf32> to vector<8x32xf32>
    %cst_4 = arith.constant dense<0.000000e+00> : vector<8x8xf32>
    %6 = tpu.matmul %4, %5, %cst_4 {dimension_numbers = #tpu.dot_dimension_numbers<[1], [1], [0], [0], [0, 0, 1, 0], [], []>} : vector<8x32xf32>, vector<8x32xf32>, vector<8x8xf32> -> vector<8x8xf32>
    %7 = tpu.iota {dimensions = array<i32: 1>} : vector<8x8xi32>
    %c5_i32 = arith.constant 5 : i32
    %8 = vector.broadcast %c5_i32 : i32 to vector<8x8xi32>
    %9 = arith.cmpi slt, %7, %8 : vector<8x8xi32>
    %cst_5 = arith.constant -1.000000e+30 : f32
    %10 = vector.broadcast %cst_5 : f32 to vector<8x8xf32>
    %11 = arith.select %9, %6, %10 : vector<8x8xi1>, vector<8x8xf32>
    %cst_6 = arith.constant dense<0xFF800000> : vector<8xf32>
    %12 = vector.multi_reduction <maximumf>, %11, %cst_6 [1] : vector<8x8xf32> to vector<8xf32>
    %13 = vector.shape_cast %12 : vector<8xf32> to vector<8x1xf32>
    %14 = vector.broadcast %13 : vector<8x1xf32> to vector<8x8xf32>
    %15 = arith.subf %11, %14 : vector<8x8xf32>
    %16 = math.exp %15 : vector<8x8xf32>
    %cst_7 = arith.constant dense<0.000000e+00> : vector<8xf32>
    %17 = vector.multi_reduction <add>, %16, %cst_7 [1] : vector<8x8xf32> to vector<8xf32>
    %18 = vector.shape_cast %17 : vector<8xf32> to vector<8x1xf32>
    %19 = tpu.reciprocal %18 {approx = true} : vector<8x1xf32> -> vector<8x1xf32>
    %20 = vector.broadcast %19 : vector<8x1xf32> to vector<8x8xf32>
    %21 = arith.mulf %16, %20 : vector<8x8xf32>
    %cst_8 = arith.constant dense<0.000000e+00> : vector<8x128xf32>
    %22 = tpu.matmul %21, %3, %cst_8 {dimension_numbers = #tpu.dot_dimension_numbers<[1], [0], [0], [1], [0, 0, 1, 1], [], []>} : vector<8x8xf32>, vector<8x128xf32>, vector<8x128xf32> -> vector<8x128xf32>
    %c0_9 = arith.constant 0 : index
    %c0_10 = arith.constant 0 : index
    %c0_11 = arith.constant 0 : index
    %23 = vector.load %arg3[%c0_9, %c0_10, %c0_11] : memref<1x8x128xf32, #tpu.memory_space<vmem>>, vector<1x8x128xf32>
    %24 = vector.shape_cast %23 : vector<1x8x128xf32> to vector<8x128xf32>
    %25 = vector.shape_cast %22 : vector<8x128xf32> to vector<1x8x128xf32>
    tpu.vector_store %arg3[%c0_9, %c0_10, %c0_11], %25 {strides = array<i32>} : memref<1x8x128xf32, #tpu.memory_space<vmem>>, vector<1x8x128xf32>,
    return
  }
  func.func @transform_0(%arg0: i32) -> (i32, i32, i32) {
    %c0_i32 = arith.constant 0 : i32
    %c0_i32_0 = arith.constant 0 : i32
    %c0_i32_1 = arith.constant 0 : i32
    return %arg0, %c0_i32, %c0_i32_0 : i32, i32, i32
  }
  func.func @transform_1(%arg0: i32) -> (i32, i32) {
    %c0_i32 = arith.constant 0 : i32
    %c0_i32_0 = arith.constant 0 : i32
    %c0_i32_1 = arith.constant 0 : i32
    return %c0_i32, %c0_i32_0 : i32, i32
  }
  func.func @transform_2(%arg0: i32) -> (i32, i32, i32) {
    %c0_i32 = arith.constant 0 : i32
    %c0_i32_0 = arith.constant 0 : i32
    %c0_i32_1 = arith.constant 0 : i32
    return %arg0, %c0_i32, %c0_i32_0 : i32, i32, i32
  }
}

</mosaic_0001>

<llo_original>
// kernel: model_forward.1
$region0: #{model_forward.1}
  #allocation0 [shape = 'u32[]', space=smem, size = 0x4, offset = 0x4, fixed_abs, tag = 'smem constant byte address 0x4 - core index']
  #allocation1 [shape = 'u32[72,128]{1,0:T(1,128)}', space=vmem, size = 0x9000, scoped, tag = 'internal scratch']
  %s0 = inlined_call_operand.vmem [shape: bf16[4,8,65], index: 0, kind: input, shape index: {}]
  %s1 = inlined_call_operand.vmem [shape: bf16[65,128], index: 1, kind: input, shape index: {}]
  %s2 = inlined_call_operand.vmem [shape: f32[4,8,128], index: 2, kind: output, shape index: {}]
  %s3 = sld [smem:[#allocation0]]
  $region41: #{model_forward.1} parent=0
    _
  %s5 = ssub.s32 1, %s3
  %s6 = scalar_select 0, %s5, %s3
  loop: start=0, step=1, limit=6
  $region2: #{model_forward.1} parent=0 // loop_pre_header
    _
  $region3: #{model_forward.1} parent=0 // loop_header
    %s8 = sphi 0, %s12
    %p9 = scmp.ge.s32.totalorder %s8, 6
    %s18 = sphi 0, %s20
    %s21 = sphi 0, %s18
    %s22 = sphi 0, %s21
    %s38 = sphi 0, %s22
    %s42 = sphi 0, %s42
    %s44 = sphi 0, %s42
    %s45 = sphi 0, %s44
    %s59 = sphi 0, %s45
    %s65 = sphi 0, %s67
    %s68 = sphi 0, %s65
    %s69 = sphi 0, %s68
    %s85 = sphi 0, %s69
  $region4: #{model_forward.1} parent=0 // loop_header_branch
    %11 = sbr.rel (%p9) target = $region8
  $region5: #{model_forward.1} parent=0 // loop_body
    %s13 = ssub.s32 %s8, 1
    %s14 = ssub.s32 %s8, 2
    %s15 = sadd.s32 %s8, 1
    %s16 = ssub.s32 %s8, %s15
    %p17 = scmp.eq.s32.totalorder %s16, 0
    %s19 = sadd.s32 %s18, 1
    %s20 = scalar_select %p17, %s18, %s19
    %p23 = pneg %p17
    %p24 = scmp.eq.s32.totalorder %s8, 3
    %p25 = por %p23, %p24
    %p26 = scmp.ne.s32.totalorder %s18, %s21
    %p27 = scmp.eq.s32.totalorder %s8, 0
    %p28 = por %p26, %p27
    %p29 = scmp.ne.s32.totalorder %s18, %s21
    %p30 = scmp.eq.s32.totalorder %s13, 3
    %p31 = por %p29, %p30
    %p32 = scmp.ne.s32.totalorder %s21, %s22
    %p33 = scmp.eq.s32.totalorder %s13, 0
    %p34 = por %p32, %p33
    %p35 = scmp.ne.s32.totalorder %s21, %s22
    %p36 = scmp.eq.s32.totalorder %s14, 3
    %p37 = por %p35, %p36
    %p39 = scmp.ne.s32.totalorder %s22, %s38
    %p40 = scmp.eq.s32.totalorder %s14, 0
    %p41 = por %p39, %p40
    %s43 = sadd.s32 %s42, 1
    %p46 = scmp.eq.s32.totalorder %s8, 3
    %p47 = scmp.ne.s32.totalorder %s42, %s44
    %p48 = scmp.eq.s32.totalorder %s8, 0
    %p49 = por %p47, %p48
    %p50 = scmp.ne.s32.totalorder %s42, %s44
    %p51 = scmp.eq.s32.totalorder %s13, 3
    %p52 = por %p50, %p51
    %p53 = scmp.ne.s32.totalorder %s44, %s45
    %p54 = scmp.eq.s32.totalorder %s13, 0
    %p55 = por %p53, %p54
    %p56 = scmp.ne.s32.totalorder %s44, %s45
    %p57 = scmp.eq.s32.totalorder %s14, 3
    %p58 = por %p56, %p57
    %p60 = scmp.ne.s32.totalorder %s45, %s59
    %p61 = scmp.eq.s32.totalorder %s14, 0
    %p62 = por %p60, %p61
    %s63 = ssub.s32 %s8, %s15
    %p64 = scmp.eq.s32.totalorder %s63, 0
    %s66 = sadd.s32 %s65, 1
    %s67 = scalar_select %p64, %s65, %s66
    %p70 = pneg %p64
    %p71 = scmp.eq.s32.totalorder %s8, 3
    %p72 = por %p70, %p71
    %p73 = scmp.ne.s32.totalorder %s65, %s68
    %p74 = scmp.eq.s32.totalorder %s8, 0
    %p75 = por %p73, %p74
    %p76 = scmp.ne.s32.totalorder %s65, %s68
    %p77 = scmp.eq.s32.totalorder %s13, 3
    %p78 = por %p76, %p77
    %p79 = scmp.ne.s32.totalorder %s68, %s69
    %p80 = scmp.eq.s32.totalorder %s13, 0
    %p81 = por %p79, %p80
    %p82 = scmp.ne.s32.totalorder %s68, %s69
    %p83 = scmp.eq.s32.totalorder %s14, 3
    %p84 = por %p82, %p83
    %p86 = scmp.ne.s32.totalorder %s69, %s85
    %p87 = scmp.eq.s32.totalorder %s14, 0
    %p88 = por %p86, %p87
    %p89 = scmp.le.s32.totalorder 1, %s8
    %p90 = scmp.lt.s32.totalorder %s8, 5
    %p91 = pnand %p89, %p90
    %p92 = pneg %p91
    // Predicated region
    $region9: #{model_forward.1} parent=5 // pred_check
      _
    $region10: #{model_forward.1} parent=5 // pred_check_branch
      %94 = sbr.rel (%p91) target = $region12
    $region11: #{model_forward.1} parent=5 // pred_region
      %s95 = ssub.s32 %s8, 1
      // Predicated region
      $region13: #{model_forward.1} parent=11 // pred_check
        %p96 = pneg %p55
      $region14: #{model_forward.1} parent=11 // pred_check_branch
        %98 = sbr.rel (%p96) target = $region16
      $region15: #{model_forward.1} parent=11 // pred_region
        _
      $region16: #{model_forward.1} parent=11 // pred_fallthru
        _
    $region12: #{model_forward.1} parent=5 // pred_fallthru
      _
    %p99 = scmp.lt.s32.totalorder %s8, 4
    // Predicated region
    $region17: #{model_forward.1} parent=5 // pred_check
      %p100 = pneg %p99
    $region18: #{model_forward.1} parent=5 // pred_check_branch
      %102 = sbr.rel (%p100) target = $region20
    $region19: #{model_forward.1} parent=5 // pred_region
      // Predicated region
      $region21: #{model_forward.1} parent=19 // pred_check
        %p103 = pneg %p28
      $region22: #{model_forward.1} parent=19 // pred_check_branch
        %105 = sbr.rel (%p103) target = $region24
      $region23: #{model_forward.1} parent=19 // pred_region
        %p106 = scmp.lt.s32.totalorder %s8, 3
        %s107 = scalar_select %p106, %s8, 3
        %s108 = smul.addr %s107, 4
        %s109 = scalar_lea.vmem %s0, %s108
      $region24: #{model_forward.1} parent=19 // pred_fallthru
        _
    $region20: #{model_forward.1} parent=5 // pred_fallthru
      _
    %p110 = scmp.le.s32.totalorder 1, %s8
    %p111 = scmp.lt.s32.totalorder %s8, 5
    %p112 = pnand %p110, %p111
    %p113 = pneg %p112
    // Predicated region
    $region25: #{model_forward.1} parent=5 // pred_check
      _
    $region26: #{model_forward.1} parent=5 // pred_check_branch
      %115 = sbr.rel (%p112) target = $region28
    $region27: #{model_forward.1} parent=5 // pred_region
      %s116 = ssub.s32 %s8, 1
      %p117 = scmp.lt.s32.totalorder %s13, 3
      %s118 = scalar_select %p117, %s13, 3
      %s119 = smul.addr %s118, 4
      %s120 = scalar_lea.vmem %s0, %s119
      %p121 = pneg %p34
      %p122 = pneg %p31
      %p123 = pneg %p55
      %p124 = pneg %p52
      %p125 = pneg %p81
      %p126 = pneg %p78
      %p127 = scmp.lt.s32.totalorder %s13, 3
      %s128 = scalar_select %p127, %s13, 3
      %s129 = smul.addr %s128, 8
      %s130 = scalar_lea.vmem %s2, %s129
      %p131 = scmp.lt.s32.totalorder %s13, 3
      %s132 = scalar_select %p131, %s13, 3
      %s133 = smul.addr %s132, 4
      %s134 = scalar_lea.vmem %s0, %s133
      %p135 = scmp.lt.s32.totalorder %s13, 3
      %s136 = scalar_select %p135, %s13, 3
      %s137 = smul.addr %s136, 8
      %s138 = scalar_lea.vmem %s2, %s137
      %v140 = vld [vmem:[%s134] sm:$0xf]
      %v141 = vld [vmem:[%s1] sm:$0xf]
      %v142 = vld [vmem:[%s1 + $0x4] sm:$0xf]
      %v143 = vld [vmem:[%s1 + $0x8] sm:$0xf]
      %v144 = vld [vmem:[%s1 + $0xc] sm:$0xf]
      %v145 = vld [vmem:[%s1 + $0x10] sm:$0xf]
      %v146 = vld [vmem:[%s1 + $0x14] sm:$0xf]
      %v147 = vld [vmem:[%s1 + $0x18] sm:$0xf]
      %v148 = vld [vmem:[%s1 + $0x1c] sm:$0xf]
      %v149 = vld [vmem:[%s1 + $0x20] sm:$0x1]
      %v159 = vunpack.c.l.b16 %v141
      %v160 = vunpack.c.l.b16 %v142
      %v161 = vunpack.c.l.b16 %v143
      %v162 = vunpack.c.l.b16 %v144
      %v163 = vunpack.c.l.b16 %v145
      %v164 = vunpack.c.l.b16 %v146
      %v165 = vunpack.c.l.b16 %v147
      %v166 = vunpack.c.l.b16 %v148
      %v167 = vunpack.c.l.b16 %v149
      %v168 = vpack.c.b16 %v160, %v159
      %v169 = vpack.c.b16 %v162, %v161
      %v170 = vpack.c.b16 %v164, %v163
      %v171 = vpack.c.b16 %v166, %v165
      %v172 = vpack.c.b16 %v167, %v167
      %vm177 = vcmask 531456
      %v179 = vsel %vm177, %v140, 0
      %vm181 = vcmask 1040384
      %v182 = vsel 0, 4294967295, 65535
      %v183 = vsel %vm181, %v182, 0
      %v185 = vand.u32 %v172, %v183
      %187 = vmatpush.bf16.msra.mxu0 0
      %188 = vmatpush.bf16.msra.mxu0 0
      %189 = vmatpush.bf16.msra.mxu0 0
      %190 = vmatpush.bf16.msra.mxu0 %v185
      %191 = vmatpush.bf16.msra.mxu0 %v171
      %192 = vmatpush.bf16.msra.mxu0 %v170
      %193 = vmatpush.bf16.msra.mxu0 %v169
      %194 = vmatpush.bf16.msra.mxu0 %v168
      %195 = vmatmul.bf16.gmra.mxu0 %v179
      %v196 = vpop.f32.mrf.mxu0
      %v197 = vadd.f32 0.0, %v196
      %v198 = vpop.f32.mrf.mxu0
      %199 = vdwg.mxu0
      %201 = vrot.lane.b32.xlu0 %v197, 96
      %v202 = vpop.permute.xlu0 %201
      %203 = vrot.lane.b32.xlu0 %v197, 64
      %v204 = vpop.permute.xlu0 %203
      %vm205 = vcmask 261120
      %v206 = vsel %vm205, %v202, 0
      %v208 = vsel %vm205, %v204, 0
      %210 = vmatpush.xpose.msra.mxu0 0.0
      %211 = vmatpush.xpose.msra.mxu0 0.0
      %212 = vmatpush.xpose.msra.mxu0 0.0
      %213 = vmatpush.xpose.msra.mxu0 0.0
      %214 = vmatpush.xpose.msra.mxu0 0.0
      %215 = vmatpush.xpose.msra.mxu0 0.0
      %216 = vmatpush.xpose.msra.mxu0 0.0
      %217 = vmatpush.xpose.msra.mxu0 0.0
      %218 = vmatpush.xpose.msra.mxu0 0.0
      %219 = vmatpush.xpose.msra.mxu0 0.0
      %220 = vmatpush.xpose.msra.mxu0 0.0
      %221 = vmatpush.xpose.msra.mxu0 0.0
      %222 = vmatpush.xpose.msra.mxu0 0.0
      %223 = vmatpush.xpose.msra.mxu0 0.0
      %224 = vmatpush.xpose.msra.mxu0 0.0
      %225 = vmatpush.xpose.msra.mxu0 %v208
      %226 = vmatmul.f32.gmra.mxu0 %v206
      %v227 = vpop.f32.mrf.mxu0
      %v228 = vadd.f32 0.0, %v227
      %229 = vdwg.mxu0
      %v230 = vlaneseq
      %v231 = vand.u32 %v230, 127
      %vm232 = vcmp.lt.s32.totalorder %v231, 5
      %v233 = vsel %vm232, %v228, -1e+30
      %vm234 = vcmask 64512
      %v235 = vsel %vm234, %v233, -inf
      %236 = vmax.xlane.f32.xlu0 %v235
      %v237 = vpop.xlane.xlu0 %236
      %v238 = vsub.f32 %v233, %v237
      %v239 = vmul.f32 %v238, 1.442695
      %v240 = vpow.pop %v239
      %v241 = vsel %vm234, %v240, 0.0
      %242 = vadd.xlane.f32.xlu0 %v241
      %v243 = vpop.xlane.xlu0 %242
      %v244 = vrcp.pop %v243
      %v245 = vmul.f32 %v240, %v244
      %v247 = vsel %vm234, %v245, 0
      %249 = vmatpush.msra.mxu0 0.0
      %250 = vmatpush.msra.mxu0 0.0
      %251 = vmatpush.msra.mxu0 0.0
      %252 = vmatpush.msra.mxu0 0.0
      %253 = vmatpush.msra.mxu0 0.0
      %254 = vmatpush.msra.mxu0 0.0
      %255 = vmatpush.msra.mxu0 0.0
      %256 = vmatpush.msra.mxu0 0.0
      %257 = vmatpush.msra.mxu0 0.0
      %258 = vmatpush.msra.mxu0 0.0
      %259 = vmatpush.msra.mxu0 0.0
      %260 = vmatpush.msra.mxu0 0.0
      %261 = vmatpush.msra.mxu0 0.0
      %262 = vmatpush.msra.mxu0 0.0
      %263 = vmatpush.msra.mxu0 0.0
      %264 = vmatpush.msra.mxu0 %v197
      %265 = vmatmul.f32.gmra.mxu0 %v247
      %v266 = vpop.f32.mrf.mxu0
      %v267 = vadd.f32 0.0, %v266
      %268 = vdwg.mxu0
      %269 = vst [vmem:[%s138] sm:$0xff] %v267
      %p270 = scmp.lt.s32.totalorder %s13, 3
      %s271 = scalar_select %p270, %s13, 3
      %s272 = smul.addr %s271, 8
      %s273 = scalar_lea.vmem %s2, %s272
      // Predicated region
      $region29: #{model_forward.1} parent=27 // pred_check
        %p274 = pneg %p78
      $region30: #{model_forward.1} parent=27 // pred_check_branch
        %276 = sbr.rel (%p274) target = $region32
      $region31: #{model_forward.1} parent=27 // pred_region
        _
      $region32: #{model_forward.1} parent=27 // pred_fallthru
        _
    $region28: #{model_forward.1} parent=5 // pred_fallthru
      _
    %p277 = scmp.le.s32.totalorder 2, %s8
    // Predicated region
    $region33: #{model_forward.1} parent=5 // pred_check
      %p278 = pneg %p277
    $region34: #{model_forward.1} parent=5 // pred_check_branch
      %280 = sbr.rel (%p278) target = $region36
    $region35: #{model_forward.1} parent=5 // pred_region
      %s281 = ssub.s32 %s8, 2
      // Predicated region
      $region37: #{model_forward.1} parent=35 // pred_check
        %p282 = pneg %p84
      $region38: #{model_forward.1} parent=35 // pred_check_branch
        %284 = sbr.rel (%p282) target = $region40
      $region39: #{model_forward.1} parent=35 // pred_region
        %p285 = scmp.lt.s32.totalorder %s14, 3
        %s286 = scalar_select %p285, %s14, 3
        %s287 = smul.addr %s286, 8
        %s288 = scalar_lea.vmem %s2, %s287
      $region40: #{model_forward.1} parent=35 // pred_fallthru
        _
    $region36: #{model_forward.1} parent=5 // pred_fallthru
      _
  $region6: #{model_forward.1} parent=0 // loop_footer
    %s12 = sadd.s32 1, %s8
  $region7: #{model_forward.1} parent=0 // loop_footer_branch
    %7 = sbr.rel target = $region3
  $region8: #{model_forward.1} parent=0 // loop_exit
    _

</llo_original>
